<compile_context>
chip_gen: v7x
topology: tpu7x:2x2x1
jax: 0.10.0
libtpu: 0.0.40
codegen_flags: <defaults>
</compile_context>

<pallas_src>
import jax
import jax.numpy as jnp
from jax.experimental import pallas as pl
from jax.experimental.pallas import tpu as pltpu


def _nchw_to_nhwc_kernel(x_ref, o_ref):
    """x_ref: (1, C, t) VMEM block  ->  o_ref: (1, t, C) VMEM block."""
    # One full-block 2-D transpose: lands on the otherwise idle XLU and is
    # hidden under the dominant HBM DMA time.
    o_ref[0, :, :] = x_ref[0, :, :].T


def _round_up(x, m):
    return -(-x // m) * m


def _vmem_budget():
    """(target bytes per padded block, vmem_limit cap) for this TPU generation."""
    target, limit = 4 << 20, 40 << 20           # safe for v7x (64 MiB physical VMEM)
    try:
        cap = int(getattr(pltpu.get_tpu_info(), "vmem_capacity_bytes", 0))
        if cap >= (100 << 20):                  # v5e / v6e: 128 MiB physical VMEM
            target, limit = 8 << 20, 64 << 20
    except Exception:
        pass
    return target, limit


def _pick_flat_tile(HW, bytes_per_lane, n_batch, target_block_bytes, min_total_steps=4):
    """Lanes of flattened H*W per block: a multiple of 128, or the full extent."""
    LANE = 128
    if HW <= LANE:
        return HW                               # full-extent block is always legal
    t = max(LANE, (target_block_bytes // max(bytes_per_lane, 1)) // LANE * LANE)
    want_steps = -(-min_total_steps // max(n_batch, 1))  # steps needed on the flat axis
    if want_steps > 1:
        t = min(t, max(LANE, (HW // want_steps) // LANE * LANE))
    if t >= HW:
        return HW
    for cand in range(t, LANE - 1, -LANE):      # prefer a tile that divides H*W
        if HW % cand == 0:
            return cand
    return t                                    # ragged last block via cdiv grid


def to_channels_last(x):
    """NCHW -> NHWC, equivalent to torch's x.permute(0, 2, 3, 1)."""
    N, C, H, W = x.shape
    HW = H * W
    itemsize = jnp.dtype(x.dtype).itemsize

    # Padded per-lane-of-t VMEM widths: input block (C, t) pads C to the dtype
    # sublane pack; output block (t, C) pads C to 128 lanes.
    sub_pack = max(1, 32 // itemsize)           # 8 (f32) / 16 (bf16) / 32 (i8)
    c_sub = _round_up(C, sub_pack)
    c_lane = _round_up(C, 128)

    target_block_bytes, vmem_cap = _vmem_budget()
    t = _pick_flat_tile(HW, max(c_sub, c_lane) * itemsize, N, target_block_bytes)

    block_in = c_sub * t * itemsize
    block_out = t * c_lane * itemsize
    vmem_limit = int(min(vmem_cap, max(16 << 20, 2 * (block_in + block_out) + (4 << 20))))

    grid = (N, pl.cdiv(HW, t))
    x_flat = x.reshape(N, C, HW)                # free view of contiguous NCHW

    out_flat = pl.pallas_call(
        _nchw_to_nhwc_kernel,
        out_shape=jax.ShapeDtypeStruct((N, HW, C), x.dtype),
        grid_spec=pltpu.PrefetchScalarGridSpec(
            num_scalar_prefetch=0,
            grid=grid,
            in_specs=[pl.BlockSpec((1, C, t), lambda n, j: (n, 0, j))],
            out_specs=pl.BlockSpec((1, t, C), lambda n, j: (n, j, 0)),
        ),
        compiler_params=pltpu.CompilerParams(
            dimension_semantics=("parallel", "parallel"),
            vmem_limit_bytes=vmem_limit,
        ),
        cost_estimate=pl.CostEstimate(
            flops=0,
            transcendentals=0,
            bytes_accessed=2 * x.size * itemsize,
        ),
    )(x_flat)

    return out_flat.reshape(N, H, W, C)         # free view of contiguous NHWC


if __name__ == "__main__":
    key = jax.random.PRNGKey(0)
    k1, k2, k3 = jax.random.split(key, 3)

    # Small shape consistent with the module: (N, C, H, W) = (2, 4, 16, 16).
    x = jax.random.normal(k1, (2, 4, 16, 16), dtype=jnp.float32)
    out = jax.block_until_ready(to_channels_last(x))
    ref = jnp.transpose(x, (0, 2, 3, 1))
    assert out.shape == (2, 16, 16, 4), out.shape
    assert jnp.array_equal(out, ref)

    # Lane-dense channel count (C = 128) with multi-block flat tiling (grid=(1, 4)).
    x2 = jax.random.normal(k2, (1, 128, 32, 64), dtype=jnp.float32)
    out2 = jax.block_until_ready(to_channels_last(x2))
    ref2 = jnp.transpose(x2, (0, 2, 3, 1))
    assert out2.shape == (1, 32, 64, 128), out2.shape
    assert jnp.array_equal(out2, ref2)

    # Ragged H*W (not a multiple of 128): exercises the cdiv / partial-block path.
    x3 = jax.random.normal(k3, (1, 8, 15, 20), dtype=jnp.float32)
    out3 = jax.block_until_ready(to_channels_last(x3))
    ref3 = jnp.transpose(x3, (0, 2, 3, 1))
    assert out3.shape == (1, 15, 20, 8), out3.shape
    assert jnp.array_equal(out3, ref3)

    print("KERNEL_OK")
</pallas_src>

<mosaic_0001>
module attributes {stable_mosaic.version = 11 : i64} {
  func.func @_nchw_to_nhwc_kernel(%arg0: i32, %arg1: i32, %arg2: memref<1x4x128xf32, #tpu.memory_space<vmem>>, %arg3: memref<1x128x4xf32, #tpu.memory_space<vmem>>) attributes {dimension_semantics = [#tpu.dimension_semantics<parallel>, #tpu.dimension_semantics<parallel>], iteration_bounds = array<i64: 2, 2>, scalar_prefetch = 0 : i64, scratch_operands = 0 : i64, tpu.core_type = #tpu.core_type<tc>, window_params = [{transform_indices = @transform_0, window_bounds = array<i64: 1, 4, 128>}, {transform_indices = @transform_1, window_bounds = array<i64: 1, 128, 4>}]} {
    %c0 = arith.constant 0 : index
    %c0_0 = arith.constant 0 : index
    %c0_1 = arith.constant 0 : index
    %0 = vector.load %arg2[%c0, %c0_0, %c0_1] : memref<1x4x128xf32, #tpu.memory_space<vmem>>, vector<1x4x128xf32>
    %1 = vector.shape_cast %0 : vector<1x4x128xf32> to vector<4x128xf32>
    %2 = tpu.transpose %1, [1, 0] : vector<4x128xf32> -> vector<128x4xf32>
    %c0_2 = arith.constant 0 : index
    %c0_3 = arith.constant 0 : index
    %c0_4 = arith.constant 0 : index
    %3 = vector.load %arg3[%c0_2, %c0_3, %c0_4] : memref<1x128x4xf32, #tpu.memory_space<vmem>>, vector<1x128x4xf32>
    %4 = vector.shape_cast %3 : vector<1x128x4xf32> to vector<128x4xf32>
    %5 = vector.shape_cast %2 : vector<128x4xf32> to vector<1x128x4xf32>
    tpu.vector_store %arg3[%c0_2, %c0_3, %c0_4], %5 {strides = array<i32>} : memref<1x128x4xf32, #tpu.memory_space<vmem>>, vector<1x128x4xf32>,
    return
  }
  func.func @transform_0(%arg0: i32, %arg1: i32) -> (i32, i32, i32) {
    %c0_i32 = arith.constant 0 : i32
    %c0_i32_0 = arith.constant 0 : i32
    return %arg0, %c0_i32, %arg1 : i32, i32, i32
  }
  func.func @transform_1(%arg0: i32, %arg1: i32) -> (i32, i32, i32) {
    %c0_i32 = arith.constant 0 : i32
    %c0_i32_0 = arith.constant 0 : i32
    return %arg0, %arg1, %c0_i32 : i32, i32, i32
  }
}

</mosaic_0001>

<llo_original>
// kernel: tpu_custom_call.1
$region0: #{tpu_custom_call.1}
  #allocation0 [shape = 'u32[]', space=smem, size = 0x4, offset = 0x4, fixed_abs, tag = 'smem constant byte address 0x4 - core index']
  #allocation1 [shape = 'u32[144,128]{1,0:T(1,128)}', space=vmem, size = 0x12000, scoped, tag = 'internal scratch']
  %s0 = inlined_call_operand.hbm [shape: f32[2,4,256], index: 0, kind: input, shape index: {}]
  %s1 = inlined_call_operand.vmem [shape: f32[2,256,4], index: 1, kind: output, shape index: {}]
  %s2 = sld [smem:[#allocation0]]
  $region41: #{tpu_custom_call.1} parent=0
    _
  %s4 = ssub.s32 1, %s2
  %s5 = scalar_select 0, %s4, %s2
  $region1: #{tpu_custom_call.1} parent=0
    #allocation2 [shape = 'u8[4096]{0}', space=vmem, size = 0x1000, scoped, tag = 'input window, operand 0']
    #allocation3 [shape = 's32[2]{0}', space=sflag, size = 0x8, scoped, tag = 'scoped memory for tpu_custom_call.1']
    %6 = vsyncpa [#allocation3], 0
    %s7 = scalar_lea.sflag [#allocation3], 1
    %8 = vsyncpa %s7, 0
    loop: start=0, step=1, limit=6
    $region2: #{tpu_custom_call.1} parent=1 // loop_pre_header
      _
    $region3: #{tpu_custom_call.1} parent=1 // loop_header
      %s10 = sphi 0, %s14
      %p11 = scmp.ge.s32.totalorder %s10, 6
      %s17 = sphi 0, %s29
      %s18 = sphi 0, %s25
      %s19 = sphi 0, %s17
      %s20 = sphi 0, %s18
      %s21 = sphi 0, %s19
      %s22 = sphi 0, %s20
      %s34 = sphi 0, %s36
      %s37 = sphi 0, %s34
      %s38 = sphi 0, %s37
      %s54 = sphi 0, %s38
      %s62 = sphi 0, %s64
      %s65 = sphi 0, %s62
      %s66 = sphi 0, %s65
      %s82 = sphi 0, %s66
    $region4: #{tpu_custom_call.1} parent=1 // loop_header_branch
      %13 = sbr.rel (%p11) target = $region8
    $region5: #{tpu_custom_call.1} parent=1 // loop_body
      %s15 = ssub.s32 %s10, 1
      %s16 = ssub.s32 %s10, 2
      %s23 = sadd.s32 1, %s18
      %p24 = scmp.ge.s32.totalorder %s23, 2
      %s25 = scalar_select %p24, 0, %s23
      %s26 = sadd.s32 1, %s17
      %s27 = scalar_select %p24, %s26, %s17
      %p28 = scmp.ge.s32.totalorder %s27, 2
      %s29 = scalar_select %p28, 0, %s27
      %s30 = ssub.s32 %s17, %s29
      %s31 = ssub.s32 %s18, %s25
      %s32 = sor.u32 %s30, %s31
      %p33 = scmp.eq.s32.totalorder %s32, 0
      %s35 = sadd.s32 %s34, 1
      %s36 = scalar_select %p33, %s34, %s35
      %p39 = pneg %p33
      %p40 = scmp.eq.s32.totalorder %s10, 3
      %p41 = por %p39, %p40
      %p42 = scmp.ne.s32.totalorder %s34, %s37
      %p43 = scmp.eq.s32.totalorder %s10, 0
      %p44 = por %p42, %p43
      %p45 = scmp.ne.s32.totalorder %s34, %s37
      %p46 = scmp.eq.s32.totalorder %s15, 3
      %p47 = por %p45, %p46
      %p48 = scmp.ne.s32.totalorder %s37, %s38
      %p49 = scmp.eq.s32.totalorder %s15, 0
      %p50 = por %p48, %p49
      %p51 = scmp.ne.s32.totalorder %s37, %s38
      %p52 = scmp.eq.s32.totalorder %s16, 3
      %p53 = por %p51, %p52
      %p55 = scmp.ne.s32.totalorder %s38, %s54
      %p56 = scmp.eq.s32.totalorder %s16, 0
      %p57 = por %p55, %p56
      %s58 = ssub.s32 %s17, %s29
      %s59 = ssub.s32 %s18, %s25
      %s60 = sor.u32 %s58, %s59
      %p61 = scmp.eq.s32.totalorder %s60, 0
      %s63 = sadd.s32 %s62, 1
      %s64 = scalar_select %p61, %s62, %s63
      %p67 = pneg %p61
      %p68 = scmp.eq.s32.totalorder %s10, 3
      %p69 = por %p67, %p68
      %p70 = scmp.ne.s32.totalorder %s62, %s65
      %p71 = scmp.eq.s32.totalorder %s10, 0
      %p72 = por %p70, %p71
      %p73 = scmp.ne.s32.totalorder %s62, %s65
      %p74 = scmp.eq.s32.totalorder %s15, 3
      %p75 = por %p73, %p74
      %p76 = scmp.ne.s32.totalorder %s65, %s66
      %p77 = scmp.eq.s32.totalorder %s15, 0
      %p78 = por %p76, %p77
      %p79 = scmp.ne.s32.totalorder %s65, %s66
      %p80 = scmp.eq.s32.totalorder %s16, 3
      %p81 = por %p79, %p80
      %p83 = scmp.ne.s32.totalorder %s66, %s82
      %p84 = scmp.eq.s32.totalorder %s16, 0
      %p85 = por %p83, %p84
      %p86 = scmp.le.s32.totalorder 1, %s10
      %p87 = scmp.lt.s32.totalorder %s10, 5
      %p88 = pnand %p86, %p87
      %p89 = pneg %p88
      // Predicated region
      $region9: #{tpu_custom_call.1} parent=5 // pred_check
        _
      $region10: #{tpu_custom_call.1} parent=5 // pred_check_branch
        %91 = sbr.rel (%p88) target = $region12
      $region11: #{tpu_custom_call.1} parent=5 // pred_region
        %s92 = ssub.s32 %s10, 1
      $region12: #{tpu_custom_call.1} parent=5 // pred_fallthru
        _
      %p93 = scmp.lt.s32.totalorder %s10, 4
      // Predicated region
      $region13: #{tpu_custom_call.1} parent=5 // pred_check
        %p94 = pneg %p93
      $region14: #{tpu_custom_call.1} parent=5 // pred_check_branch
        %96 = sbr.rel (%p94) target = $region16
      $region15: #{tpu_custom_call.1} parent=5 // pred_region
        // Predicated region
        $region17: #{tpu_custom_call.1} parent=15 // pred_check
          %p97 = pneg %p44
        $region18: #{tpu_custom_call.1} parent=15 // pred_check_branch
          %99 = sbr.rel (%p97) target = $region20
        $region19: #{tpu_custom_call.1} parent=15 // pred_region
          %s100 = sand.u32 %s34, 1
          %s101 = scalar_lea.sflag [#allocation3], %s100
          %s102 = sand.u32 %s34, 1
          %s103 = smul.addr %s102, 4
          %s104 = scalar_lea.vmem [#allocation2], %s103
          %s106 = ssub.s32 64, 64
          %107 = vsyncadd %s101, %s106
          %s108 = smul.addr %s17, 2
          %s109 = sadd.s32 %s18, %s108
          %s110 = smul.addr %s109, 64
          %s111 = scalar_lea.hbm %s0, %s110
          %s113 = sshll.u32 %s104, 4
          %s114 = int_to_ptr.vmem [resolvable:$true] %s113
          %116 = dma.hbm_to_vmem [thread:$0]  %s111, 64, %s114, %s101
        $region20: #{tpu_custom_call.1} parent=15 // pred_fallthru
          _
      $region16: #{tpu_custom_call.1} parent=5 // pred_fallthru
        _
      %p117 = scmp.le.s32.totalorder 1, %s10
      %p118 = scmp.lt.s32.totalorder %s10, 5
      %p119 = pnand %p117, %p118
      %p120 = pneg %p119
      // Predicated region
      $region21: #{tpu_custom_call.1} parent=5 // pred_check
        _
      $region22: #{tpu_custom_call.1} parent=5 // pred_check_branch
        %122 = sbr.rel (%p119) target = $region24
      $region23: #{tpu_custom_call.1} parent=5 // pred_region
        %s123 = ssub.s32 %s10, 1
        %s124 = sand.u32 %s37, 1
        %s125 = scalar_lea.sflag [#allocation3], %s124
        %s126 = sand.u32 %s37, 1
        %s127 = smul.addr %s126, 4
        %s128 = scalar_lea.vmem [#allocation2], %s127
        // Predicated region
        $region25: #{tpu_custom_call.1} parent=23 // pred_check
          %p129 = pneg %p50
        $region26: #{tpu_custom_call.1} parent=23 // pred_check_branch
          %131 = sbr.rel (%p129) target = $region28
        $region27: #{tpu_custom_call.1} parent=23 // pred_region
          %132 = dma.done %s125, 64
        $region28: #{tpu_custom_call.1} parent=23 // pred_fallthru
          _
        %s133 = sand.u32 %s37, 1
        %s134 = scalar_lea.sflag [#allocation3], %s133
        %s135 = sand.u32 %s37, 1
        %s136 = smul.addr %s135, 4
        %s137 = scalar_lea.vmem [#allocation2], %s136
        %p138 = pneg %p50
        %p139 = pneg %p47
        %p140 = pneg %p78
        %p141 = pneg %p75
        %s142 = smul.u32 16, %s20
        %p143 = scmp.lt.s32.totalorder %s19, 1
        %s144 = scalar_select %p143, %s19, 1
        %p145 = scmp.lt.s32.totalorder %s142, 31
        %s146 = scalar_select %p145, %s142, 31
        %s147 = smul.addr %s144, 32
        %s148 = sadd.s32 %s146, %s147
        %s149 = smul.addr %s148, 8
        %s150 = scalar_lea.vmem %s1, %s149
        %s151 = smul.u32 16, %s20
        %p152 = scmp.lt.s32.totalorder %s19, 1
        %s153 = scalar_select %p152, %s19, 1
        %p154 = scmp.lt.s32.totalorder %s151, 31
        %s155 = scalar_select %p154, %s151, 31
        %s156 = smul.addr %s153, 32
        %s157 = sadd.s32 %s155, %s156
        %s158 = smul.addr %s157, 8
        %s159 = scalar_lea.vmem %s1, %s158
        %s160 = smul.u32 16, %s20
        %v161 = vld [vmem:[%s128] sm:$0xf]
        %162 = vxpose.xlu0.b32.start [1/16] %v161, 128
        %163 = vxpose.xlu0.b32.cont [2/16] 0.0, 128
        %164 = vxpose.xlu0.b32.cont [3/16] 0.0, 128
        %165 = vxpose.xlu0.b32.cont [4/16] 0.0, 128
        %166 = vxpose.xlu0.b32.cont [5/16] 0.0, 128
        %167 = vxpose.xlu0.b32.cont [6/16] 0.0, 128
        %168 = vxpose.xlu0.b32.cont [7/16] 0.0, 128
        %169 = vxpose.xlu0.b32.cont [8/16] 0.0, 128
        %170 = vxpose.xlu0.b32.cont [9/16] 0.0, 128
        %171 = vxpose.xlu0.b32.cont [10/16] 0.0, 128
        %172 = vxpose.xlu0.b32.cont [11/16] 0.0, 128
        %173 = vxpose.xlu0.b32.cont [12/16] 0.0, 128
        %174 = vxpose.xlu0.b32.cont [13/16] 0.0, 128
        %175 = vxpose.xlu0.b32.cont [14/16] 0.0, 128
        %176 = vxpose.xlu0.b32.cont [15/16] 0.0, 128
        %177 = vxpose.xlu0.b32.end [16/16] 0.0, 128
        %v178 = vpop.trf.xlu0
        %v179 = vpop.trf.xlu0
        %v180 = vpop.trf.xlu0
        %v181 = vpop.trf.xlu0
        %v182 = vpop.trf.xlu0
        %v183 = vpop.trf.xlu0
        %v184 = vpop.trf.xlu0
        %v185 = vpop.trf.xlu0
        %v186 = vpop.trf.xlu0
        %v187 = vpop.trf.xlu0
        %v188 = vpop.trf.xlu0
        %v189 = vpop.trf.xlu0
        %v190 = vpop.trf.xlu0
        %v191 = vpop.trf.xlu0
        %v192 = vpop.trf.xlu0
        %v193 = vpop.trf.xlu0
        %vm194 = vcmask 31744
        %195 = vst.msk [vmem:[%s159] sm:$0xff] %vm194, %v178
        %196 = vst.msk [vmem:[%s159 + $0x8] sm:$0xff] %vm194, %v179
        %197 = vst.msk [vmem:[%s159 + $0x10] sm:$0xff] %vm194, %v180
        %198 = vst.msk [vmem:[%s159 + $0x18] sm:$0xff] %vm194, %v181
        %199 = vst.msk [vmem:[%s159 + $0x20] sm:$0xff] %vm194, %v182
        %200 = vst.msk [vmem:[%s159 + $0x28] sm:$0xff] %vm194, %v183
        %201 = vst.msk [vmem:[%s159 + $0x30] sm:$0xff] %vm194, %v184
        %202 = vst.msk [vmem:[%s159 + $0x38] sm:$0xff] %vm194, %v185
        %203 = vst.msk [vmem:[%s159 + $0x40] sm:$0xff] %vm194, %v186
        %204 = vst.msk [vmem:[%s159 + $0x48] sm:$0xff] %vm194, %v187
        %205 = vst.msk [vmem:[%s159 + $0x50] sm:$0xff] %vm194, %v188
        %206 = vst.msk [vmem:[%s159 + $0x58] sm:$0xff] %vm194, %v189
        %207 = vst.msk [vmem:[%s159 + $0x60] sm:$0xff] %vm194, %v190
        %208 = vst.msk [vmem:[%s159 + $0x68] sm:$0xff] %vm194, %v191
        %209 = vst.msk [vmem:[%s159 + $0x70] sm:$0xff] %vm194, %v192
        %210 = vst.msk [vmem:[%s159 + $0x78] sm:$0xff] %vm194, %v193
        %s211 = smul.u32 16, %s20
        %p212 = scmp.lt.s32.totalorder %s19, 1
        %s213 = scalar_select %p212, %s19, 1
        %p214 = scmp.lt.s32.totalorder %s211, 31
        %s215 = scalar_select %p214, %s211, 31
        %s216 = smul.addr %s213, 32
        %s217 = sadd.s32 %s215, %s216
        %s218 = smul.addr %s217, 8
        %s219 = scalar_lea.vmem %s1, %s218
        // Predicated region
        $region29: #{tpu_custom_call.1} parent=23 // pred_check
          %p220 = pneg %p75
        $region30: #{tpu_custom_call.1} parent=23 // pred_check_branch
          %222 = sbr.rel (%p220) target = $region32
        $region31: #{tpu_custom_call.1} parent=23 // pred_region
          %s223 = smul.u32 16, %s20
        $region32: #{tpu_custom_call.1} parent=23 // pred_fallthru
          _
      $region24: #{tpu_custom_call.1} parent=5 // pred_fallthru
        _
      %p224 = scmp.le.s32.totalorder 2, %s10
      // Predicated region
      $region33: #{tpu_custom_call.1} parent=5 // pred_check
        %p225 = pneg %p224
      $region34: #{tpu_custom_call.1} parent=5 // pred_check_branch
        %227 = sbr.rel (%p225) target = $region36
      $region35: #{tpu_custom_call.1} parent=5 // pred_region
        %s228 = ssub.s32 %s10, 2
        // Predicated region
        $region37: #{tpu_custom_call.1} parent=35 // pred_check
          %p229 = pneg %p81
        $region38: #{tpu_custom_call.1} parent=35 // pred_check_branch
          %231 = sbr.rel (%p229) target = $region40
        $region39: #{tpu_custom_call.1} parent=35 // pred_region
          %s232 = smul.u32 16, %s22
          %p233 = scmp.lt.s32.totalorder %s21, 1
          %s234 = scalar_select %p233, %s21, 1
          %p235 = scmp.lt.s32.totalorder %s232, 31
          %s236 = scalar_select %p235, %s232, 31
          %s237 = smul.addr %s234, 32
          %s238 = sadd.s32 %s236, %s237
          %s239 = smul.addr %s238, 8
          %s240 = scalar_lea.vmem %s1, %s239
        $region40: #{tpu_custom_call.1} parent=35 // pred_fallthru
          _
      $region36: #{tpu_custom_call.1} parent=5 // pred_fallthru
        _
    $region6: #{tpu_custom_call.1} parent=1 // loop_footer
      %s14 = sadd.s32 1, %s10
    $region7: #{tpu_custom_call.1} parent=1 // loop_footer_branch
      %9 = sbr.rel target = $region3
    $region8: #{tpu_custom_call.1} parent=1 // loop_exit
      _
    %241 = vsyncpa [#allocation3], 1
    %s242 = scalar_lea.sflag [#allocation3], 1
    %243 = vsyncpa %s242, 1

</llo_original>
